<compile_context>
chip_gen: v7x
topology: tpu7x:2x2x1
jax: 0.10.0
libtpu: 0.0.40
codegen_flags: <defaults>
</compile_context>

<pallas_src>
import math
import numpy as np
import jax
import jax.numpy as jnp
from jax.experimental import pallas as pl
from jax.experimental.pallas import tpu as pltpu

# ---- config (mirrors the `config` object the module refers to) -------------
D_MODEL = 32
D_MLP = 128
SEQ = 2
SEQ_LEN = 16

TILE_M = 256  # rows per grid step on the batched/tiled path (multiple of 8)


def _mlp_kernel(x_ref, w_in_ref, b_ref, w_out_ref, out_ref):
    # x_ref:   (TM, d_model) row tile
    # w_in_ref:(d_model, d_mlp), w_out_ref:(d_mlp, d_model) — same block every step
    # b_ref:   (2, W) packed biases: row 0 lanes[:d_mlp] = b_in,
    #                                row 1 lanes[:d_model] = b_out
    x = x_ref[...]                                         # (TM, Dm)
    w_in = w_in_ref[...]                                   # (Dm, Dmlp)
    w_out = w_out_ref[...]                                 # (Dmlp, Dm)
    dmlp = w_in.shape[1]
    dm = w_out.shape[1]
    b_in = b_ref[0:1, :dmlp]                               # (1, Dmlp) row-broadcast
    b_out = b_ref[1:2, :dm]                                # (1, Dm)   row-broadcast

    h = jnp.dot(x, w_in, preferred_element_type=jnp.float32) + b_in      # MXU + VPU
    a = jnp.maximum(h, 0.0)                                              # ReLU (VPU)
    out = jnp.dot(a, w_out, preferred_element_type=jnp.float32) + b_out  # MXU + VPU

    out_ref[...] = out.astype(out_ref.dtype)


def mlp(x, w_in, b_in, w_out, b_out, *, tile_m=TILE_M):
    """x: (seq, seq_len, d_model) f32 -> (seq, seq_len, d_model) f32."""
    seq, seq_len, dm = x.shape
    dmlp = w_in.shape[1]
    m = seq * seq_len

    # Position-wise MLP: flatten leading dims into one M-row slab.
    x2 = x.reshape(m, dm)

    # Pack both biases into a single (2, W) slab -> one fewer exposed prologue DMA.
    wb = max(dmlp, dm)
    b_packed = jnp.zeros((2, wb), jnp.float32)
    b_packed = b_packed.at[0, :dmlp].set(b_in.astype(jnp.float32))
    b_packed = b_packed.at[1, :dm].set(b_out.astype(jnp.float32))

    if m <= tile_m:
        # Single grid step: block == full extent (satisfies (8,128) rule),
        # no per-row-tile pipeline prologue/epilogue.
        tm, grid_m, m_pad = m, 1, m
        x_in = x2
        semantics = ("arbitrary",)     # don't split a tiny grid across TCs
    else:
        # Batched path: tile M, shard tiles across cores ("parallel").
        tm = tile_m
        grid_m = pl.cdiv(m, tm)
        m_pad = grid_m * tm
        x_in = jnp.pad(x2, ((0, m_pad - m), (0, 0))) if m_pad != m else x2
        semantics = ("parallel",)

    flops = 2 * m_pad * (dm * dmlp + dmlp * dm)
    bytes_accessed = 4 * (2 * m_pad * dm + 2 * dm * dmlp + dmlp + dm)

    out2 = pl.pallas_call(
        _mlp_kernel,
        out_shape=jax.ShapeDtypeStruct((m_pad, dm), x.dtype),
        grid_spec=pltpu.PrefetchScalarGridSpec(
            num_scalar_prefetch=0,
            grid=(grid_m,),
            in_specs=[
                pl.BlockSpec((tm, dm), lambda i: (i, 0)),      # x row tile
                pl.BlockSpec((dm, dmlp), lambda i: (0, 0)),    # W_in (resident across steps)
                pl.BlockSpec((2, wb), lambda i: (0, 0)),       # packed biases
                pl.BlockSpec((dmlp, dm), lambda i: (0, 0)),    # W_out (resident across steps)
            ],
            out_specs=pl.BlockSpec((tm, dm), lambda i: (i, 0)),
        ),
        compiler_params=pltpu.CompilerParams(
            dimension_semantics=semantics,
        ),
        cost_estimate=pl.CostEstimate(
            flops=flops, transcendentals=0, bytes_accessed=bytes_accessed
        ),
    )(x_in, w_in, b_packed, w_out)

    return out2[:m].reshape(seq, seq_len, dm)


def _kaiming_uniform_T(key, out_shape):
    """Mimic nn.init.kaiming_uniform_(torch.empty(*shape).T).T:
    kaiming uniform on the transposed tensor (fan_in = out_shape[0]),
    then transpose back so the parameter has shape `out_shape`."""
    fan_in = out_shape[0]
    gain = math.sqrt(2.0 / (1.0 + math.sqrt(5.0) ** 2))  # default a=sqrt(5)
    bound = gain * math.sqrt(3.0 / fan_in)
    return jax.random.uniform(key, out_shape, jnp.float32, -bound, bound)


def _reference(x, w_in, b_in, w_out, b_out):
    h = jnp.einsum('sld,dm->slm', x, w_in) + b_in
    a = jax.nn.relu(h)
    return jnp.einsum('slm,md->sld', a, w_out) + b_out


if __name__ == "__main__":
    key = jax.random.PRNGKey(0)
    kx, k1, k2, kb = jax.random.split(key, 4)

    w_in = _kaiming_uniform_T(k1, (D_MODEL, D_MLP))
    b_in = jnp.zeros((D_MLP,), jnp.float32)           # spec zero-inits biases
    w_out = _kaiming_uniform_T(k2, (D_MLP, D_MODEL))
    b_out = jnp.zeros((D_MODEL,), jnp.float32)

    # 1) module-sized input: single grid step path
    x = jax.random.normal(kx, (SEQ, SEQ_LEN, D_MODEL), jnp.float32)
    out = jax.block_until_ready(mlp(x, w_in, b_in, w_out, b_out))
    ref = _reference(x, w_in, b_in, w_out, b_out)
    assert out.shape == (SEQ, SEQ_LEN, D_MODEL)
    np.testing.assert_allclose(np.asarray(out), np.asarray(ref), rtol=1e-5, atol=1e-5)

    # 2) batched input: exercises the tiled / "parallel" path (M = 512 -> 2 tiles)
    xb = jax.random.normal(kb, (8, 64, D_MODEL), jnp.float32)
    outb = jax.block_until_ready(mlp(xb, w_in, b_in, w_out, b_out))
    refb = _reference(xb, w_in, b_in, w_out, b_out)
    np.testing.assert_allclose(np.asarray(outb), np.asarray(refb), rtol=1e-5, atol=1e-5)

    print("KERNEL_OK")
</pallas_src>

<mosaic_0001>
module attributes {stable_mosaic.version = 11 : i64} {
  func.func @_mlp_kernel(%arg0: i32, %arg1: memref<32x32xf32, #tpu.memory_space<vmem>>, %arg2: memref<32x128xf32, #tpu.memory_space<vmem>>, %arg3: memref<2x128xf32, #tpu.memory_space<vmem>>, %arg4: memref<128x32xf32, #tpu.memory_space<vmem>>, %arg5: memref<32x32xf32, #tpu.memory_space<vmem>>) attributes {dimension_semantics = [#tpu.dimension_semantics<arbitrary>], iteration_bounds = array<i64: 1>, scalar_prefetch = 0 : i64, scratch_operands = 0 : i64, tpu.core_type = #tpu.core_type<tc>, window_params = [{transform_indices = @transform_0, window_bounds = array<i64: 32, 32>}, {pipeline_mode = #tpu.pipeline_mode<synchronous>, transform_indices = @transform_1, window_bounds = array<i64: 32, 128>}, {pipeline_mode = #tpu.pipeline_mode<synchronous>, transform_indices = @transform_2, window_bounds = array<i64: 2, 128>}, {pipeline_mode = #tpu.pipeline_mode<synchronous>, transform_indices = @transform_3, window_bounds = array<i64: 128, 32>}, {transform_indices = @transform_4, window_bounds = array<i64: 32, 32>}]} {
    %c0 = arith.constant 0 : index
    %c0_0 = arith.constant 0 : index
    %0 = vector.load %arg1[%c0, %c0_0] : memref<32x32xf32, #tpu.memory_space<vmem>>, vector<32x32xf32>
    %c0_1 = arith.constant 0 : index
    %c0_2 = arith.constant 0 : index
    %1 = vector.load %arg2[%c0_1, %c0_2] : memref<32x128xf32, #tpu.memory_space<vmem>>, vector<32x128xf32>
    %c0_3 = arith.constant 0 : index
    %c0_4 = arith.constant 0 : index
    %2 = vector.load %arg4[%c0_3, %c0_4] : memref<128x32xf32, #tpu.memory_space<vmem>>, vector<128x32xf32>
    %c0_5 = arith.constant 0 : index
    %c0_6 = arith.constant 0 : index
    %3 = vector.load %arg3[%c0_5, %c0_6] : memref<2x128xf32, #tpu.memory_space<vmem>>, vector<1x128xf32>
    %c1 = arith.constant 1 : index
    %c0_7 = arith.constant 0 : index
    %4 = vector.load %arg3[%c1, %c0_7] : memref<2x128xf32, #tpu.memory_space<vmem>>, vector<1x32xf32>
    %cst = arith.constant dense<0.000000e+00> : vector<32x128xf32>
    %5 = tpu.matmul %0, %1, %cst {dimension_numbers = #tpu.dot_dimension_numbers<[1], [0], [0], [1], [0, 0, 1, 1], [], []>} : vector<32x32xf32>, vector<32x128xf32>, vector<32x128xf32> -> vector<32x128xf32>
    %6 = vector.broadcast %3 : vector<1x128xf32> to vector<32x128xf32>
    %7 = arith.addf %5, %6 : vector<32x128xf32>
    %cst_8 = arith.constant 0.000000e+00 : f32
    %8 = vector.broadcast %cst_8 : f32 to vector<32x128xf32>
    %9 = arith.maximumf %7, %8 : vector<32x128xf32>
    %cst_9 = arith.constant dense<0.000000e+00> : vector<32x32xf32>
    %10 = tpu.matmul %9, %2, %cst_9 {dimension_numbers = #tpu.dot_dimension_numbers<[1], [0], [0], [1], [0, 0, 1, 1], [], []>} : vector<32x128xf32>, vector<128x32xf32>, vector<32x32xf32> -> vector<32x32xf32>
    %11 = vector.broadcast %4 : vector<1x32xf32> to vector<32x32xf32>
    %12 = arith.addf %10, %11 : vector<32x32xf32>
    %c0_10 = arith.constant 0 : index
    %c0_11 = arith.constant 0 : index
    %13 = vector.load %arg5[%c0_10, %c0_11] : memref<32x32xf32, #tpu.memory_space<vmem>>, vector<32x32xf32>
    tpu.vector_store %arg5[%c0_10, %c0_11], %12 {strides = array<i32>} : memref<32x32xf32, #tpu.memory_space<vmem>>, vector<32x32xf32>,
    return
  }
  func.func @transform_0(%arg0: i32) -> (i32, i32) {
    %c0_i32 = arith.constant 0 : i32
    %c0_i32_0 = arith.constant 0 : i32
    return %arg0, %c0_i32 : i32, i32
  }
  func.func @transform_1(%arg0: i32) -> (i32, i32) {
    %c0_i32 = arith.constant 0 : i32
    %c0_i32_0 = arith.constant 0 : i32
    %c0_i32_1 = arith.constant 0 : i32
    return %c0_i32, %c0_i32_0 : i32, i32
  }
  func.func @transform_2(%arg0: i32) -> (i32, i32) {
    %c0_i32 = arith.constant 0 : i32
    %c0_i32_0 = arith.constant 0 : i32
    %c0_i32_1 = arith.constant 0 : i32
    return %c0_i32, %c0_i32_0 : i32, i32
  }
  func.func @transform_3(%arg0: i32) -> (i32, i32) {
    %c0_i32 = arith.constant 0 : i32
    %c0_i32_0 = arith.constant 0 : i32
    %c0_i32_1 = arith.constant 0 : i32
    return %c0_i32, %c0_i32_0 : i32, i32
  }
  func.func @transform_4(%arg0: i32) -> (i32, i32) {
    %c0_i32 = arith.constant 0 : i32
    %c0_i32_0 = arith.constant 0 : i32
    return %arg0, %c0_i32 : i32, i32
  }
}

</mosaic_0001>

<llo_original>
// kernel: tpu_custom_call.1
$region0: #{tpu_custom_call.1}
  #allocation0 [shape = 'u32[]', space=smem, size = 0x4, offset = 0x4, fixed_abs, tag = 'smem constant byte address 0x4 - core index']
  #allocation1 [shape = 'u32[144,128]{1,0:T(1,128)}', space=vmem, size = 0x12000, scoped, tag = 'internal scratch']
  %s0 = inlined_call_operand.vmem [shape: f32[32,32], index: 0, kind: input, shape index: {}]
  %s1 = inlined_call_operand.vmem [shape: f32[32,128], index: 1, kind: input, shape index: {}]
  %s2 = inlined_call_operand.vmem [shape: f32[2,128], index: 2, kind: input, shape index: {}]
  %s3 = inlined_call_operand.vmem [shape: f32[128,32], index: 3, kind: input, shape index: {}]
  %s4 = inlined_call_operand.hbm [shape: f32[32,32], index: 4, kind: output, shape index: {}]
  %s5 = sld [smem:[#allocation0]]
  $region26: #{tpu_custom_call.1} parent=0
    _
  %s7 = ssub.s32 1, %s5
  %s8 = scalar_select 0, %s7, %s5
  $region1: #{tpu_custom_call.1} parent=0
    #allocation2 [shape = 'u8[16384]{0}', space=vmem, size = 0x4000, scoped, tag = 'output window, operand 0, single buffered']
    #allocation3 [shape = 's32[1]{0}', space=sflag, size = 0x4, scoped, tag = 'scoped memory for tpu_custom_call.1']
    %9 = vsyncpa [#allocation3], 0
    // Predicated region
    $region2: #{tpu_custom_call.1} parent=1 // pred_check
      _
    $region3: #{tpu_custom_call.1} parent=1 // pred_check_branch
      %11 = sbr.rel (0) target = $region5
    $region4: #{tpu_custom_call.1} parent=1 // pred_region
      _
    $region5: #{tpu_custom_call.1} parent=1 // pred_fallthru
      _
    // Predicated region
    $region6: #{tpu_custom_call.1} parent=1 // pred_check
      _
    $region7: #{tpu_custom_call.1} parent=1 // pred_check_branch
      %13 = sbr.rel (0) target = $region9
    $region8: #{tpu_custom_call.1} parent=1 // pred_region
      _
    $region9: #{tpu_custom_call.1} parent=1 // pred_fallthru
      _
    // Predicated region
    $region10: #{tpu_custom_call.1} parent=1 // pred_check
      _
    $region11: #{tpu_custom_call.1} parent=1 // pred_check_branch
      %15 = sbr.rel (0) target = $region13
    $region12: #{tpu_custom_call.1} parent=1 // pred_region
      _
    $region13: #{tpu_custom_call.1} parent=1 // pred_fallthru
      _
    // Predicated region
    $region14: #{tpu_custom_call.1} parent=1 // pred_check
      _
    $region15: #{tpu_custom_call.1} parent=1 // pred_check_branch
      %17 = sbr.rel (0) target = $region17
    $region16: #{tpu_custom_call.1} parent=1 // pred_region
      _
    $region17: #{tpu_custom_call.1} parent=1 // pred_fallthru
      _
    %v18 = vld [vmem:[%s0] sm:$0xff]
    %v19 = vld [vmem:[%s0 + $0x8] sm:$0xff]
    %v20 = vld [vmem:[%s0 + $0x10] sm:$0xff]
    %v21 = vld [vmem:[%s0 + $0x18] sm:$0xff]
    %v22 = vld [vmem:[%s1] sm:$0xff]
    %v23 = vld [vmem:[%s1 + $0x8] sm:$0xff]
    %v24 = vld [vmem:[%s1 + $0x10] sm:$0xff]
    %v25 = vld [vmem:[%s1 + $0x18] sm:$0xff]
    %v26 = vld [vmem:[%s3] sm:$0xff]
    %v27 = vld [vmem:[%s3 + $0x8] sm:$0xff]
    %v28 = vld [vmem:[%s3 + $0x10] sm:$0xff]
    %v29 = vld [vmem:[%s3 + $0x18] sm:$0xff]
    %v30 = vld [vmem:[%s3 + $0x20] sm:$0xff]
    %v31 = vld [vmem:[%s3 + $0x28] sm:$0xff]
    %v32 = vld [vmem:[%s3 + $0x30] sm:$0xff]
    %v33 = vld [vmem:[%s3 + $0x38] sm:$0xff]
    %v34 = vld [vmem:[%s3 + $0x40] sm:$0xff]
    %v35 = vld [vmem:[%s3 + $0x48] sm:$0xff]
    %v36 = vld [vmem:[%s3 + $0x50] sm:$0xff]
    %v37 = vld [vmem:[%s3 + $0x58] sm:$0xff]
    %v38 = vld [vmem:[%s3 + $0x60] sm:$0xff]
    %v39 = vld [vmem:[%s3 + $0x68] sm:$0xff]
    %v40 = vld [vmem:[%s3 + $0x70] sm:$0xff]
    %v41 = vld [vmem:[%s3 + $0x78] sm:$0xff]
    %v42 = vld [vmem:[%s2] sm:$0x1]
    %v43 = vld [vmem:[%s2 + $0x1] sm:$0x1]
    %v44 = vlaneseq
    %v45 = vshrl.u32 %v44, 7
    %v46 = vsub.s32 0, %v45
    %v47 = vrot.slane %v42, %v46
    %vm48 = vcmask 261120
    %v50 = vsel %vm48, %v18, 0
    %v53 = vsel %vm48, %v19, 0
    %v56 = vsel %vm48, %v20, 0
    %v59 = vsel %vm48, %v21, 0
    %61 = vmatprep.subr.mxu0 0.0
    %62 = vmatpush1.msra.mxu0 %v22
    %63 = vmatprep.subr.mxu0 0.0
    %64 = vmatpush1.msra.mxu0 %v23
    %65 = vmatprep.subr.mxu0 0.0
    %66 = vmatpush1.msra.mxu0 %v24
    %67 = vmatprep.subr.mxu0 0.0
    %68 = vmatpush1.msra.mxu0 %v25
    %69 = vmatprep.subr.mxu0 0.0
    %70 = vmatpush1.msra.mxu0 0.0
    %71 = vmatprep.subr.mxu0 0.0
    %72 = vmatpush1.msra.mxu0 0.0
    %73 = vmatprep.subr.mxu0 0.0
    %74 = vmatpush1.msra.mxu0 0.0
    %75 = vmatprep.subr.mxu0 0.0
    %76 = vmatpush1.msra.mxu0 0.0
    %77 = vmatprep.subr.mxu0 0.0
    %78 = vmatpush1.msra.mxu0 0.0
    %79 = vmatprep.subr.mxu0 0.0
    %80 = vmatpush1.msra.mxu0 0.0
    %81 = vmatprep.subr.mxu0 0.0
    %82 = vmatpush1.msra.mxu0 0.0
    %83 = vmatprep.subr.mxu0 0.0
    %84 = vmatpush1.msra.mxu0 0.0
    %85 = vmatprep.subr.mxu0 0.0
    %86 = vmatpush1.msra.mxu0 0.0
    %87 = vmatprep.subr.mxu0 0.0
    %88 = vmatpush1.msra.mxu0 0.0
    %89 = vmatprep.subr.mxu0 0.0
    %90 = vmatpush1.msra.mxu0 0.0
    %91 = vmatprep.subr.mxu0 0.0
    %92 = vmatpush1.msra.mxu0 0.0
    %93 = vmatprep.subr.mxu0 0.0
    %94 = vmatpush1.msra.mxu0 0.0
    %95 = vmatprep.subr.mxu0 0.0
    %96 = vmatpush1.msra.mxu0 0.0
    %97 = vmatprep.subr.mxu0 0.0
    %98 = vmatpush1.msra.mxu0 0.0
    %99 = vmatprep.subr.mxu0 0.0
    %100 = vmatpush1.msra.mxu0 0.0
    %101 = vmatprep.subr.mxu0 0.0
    %102 = vmatpush1.msra.mxu0 0.0
    %103 = vmatprep.subr.mxu0 0.0
    %104 = vmatpush1.msra.mxu0 0.0
    %105 = vmatprep.subr.mxu0 0.0
    %106 = vmatpush1.msra.mxu0 0.0
    %107 = vmatprep.subr.mxu0 0.0
    %108 = vmatpush1.msra.mxu0 0.0
    %109 = vmatprep.subr.mxu0 0.0
    %110 = vmatpush1.msra.mxu0 0.0
    %111 = vmatprep.subr.mxu0 0.0
    %112 = vmatpush1.msra.mxu0 0.0
    %113 = vmatprep.subr.mxu0 0.0
    %114 = vmatpush1.msra.mxu0 0.0
    %115 = vmatprep.subr.mxu0 0.0
    %116 = vmatpush1.msra.mxu0 0.0
    %117 = vmatprep.subr.mxu0 0.0
    %118 = vmatpush1.msra.mxu0 0.0
    %119 = vmatprep.subr.mxu0 0.0
    %120 = vmatpush1.msra.mxu0 0.0
    %121 = vmatprep.subr.mxu0 0.0
    %122 = vmatpush1.msra.mxu0 0.0
    %123 = vmatprep.subr.mxu0 0.0
    %124 = vmatpush1.msra.mxu0 0.0
    %125 = vmatprep.mubr.f32.mxu0 0.0
    %126 = vmatmul.mubr.f32.gmra.mrb[0].mxu0 %v50
    %v127 = vpop.f32.mrb[0].mxu0
    %v128 = vadd.f32 %v47, %v127
    %v129 = vpop.f32.mrb[0].mxu0
    %130 = vmatprep.mubr.f32.mxu0 0.0
    %131 = vmatmul.mubr.f32.gmra.mrb[0].mxu0 %v53
    %v132 = vpop.f32.mrb[0].mxu0
    %v133 = vadd.f32 %v47, %v132
    %v134 = vpop.f32.mrb[0].mxu0
    %135 = vmatprep.mubr.f32.mxu0 0.0
    %136 = vmatmul.mubr.f32.gmra.mrb[0].mxu0 %v56
    %v137 = vpop.f32.mrb[0].mxu0
    %v138 = vadd.f32 %v47, %v137
    %v139 = vpop.f32.mrb[0].mxu0
    %140 = vmatprep.mubr.f32.mxu0 0.0
    %141 = vmatmul.mubr.f32.gmra.mrb[0].mxu0 %v59
    %v142 = vpop.f32.mrb[0].mxu0
    %v143 = vadd.f32 %v47, %v142
    %v144 = vpop.f32.mrb[0].mxu0
    %145 = vdwg.mxu0
    %v146 = vmax.f32 %v128, 0.0
    %v147 = vmax.f32 %v133, 0.0
    %v148 = vmax.f32 %v138, 0.0
    %v149 = vmax.f32 %v143, 0.0
    %v150 = vlaneseq
    %v151 = vshrl.u32 %v150, 7
    %v152 = vsub.s32 0, %v151
    %v153 = vrot.slane %v43, %v152
    %154 = vmatprep.subr.mxu0 0.0
    %155 = vmatpush1.msra.mxu0 %v26
    %156 = vmatprep.subr.mxu0 0.0
    %157 = vmatpush1.msra.mxu0 %v27
    %158 = vmatprep.subr.mxu0 0.0
    %159 = vmatpush1.msra.mxu0 %v28
    %160 = vmatprep.subr.mxu0 0.0
    %161 = vmatpush1.msra.mxu0 %v29
    %162 = vmatprep.subr.mxu0 0.0
    %163 = vmatpush1.msra.mxu0 %v30
    %164 = vmatprep.subr.mxu0 0.0
    %165 = vmatpush1.msra.mxu0 %v31
    %166 = vmatprep.subr.mxu0 0.0
    %167 = vmatpush1.msra.mxu0 %v32
    %168 = vmatprep.subr.mxu0 0.0
    %169 = vmatpush1.msra.mxu0 %v33
    %170 = vmatprep.subr.mxu0 0.0
    %171 = vmatpush1.msra.mxu0 %v34
    %172 = vmatprep.subr.mxu0 0.0
    %173 = vmatpush1.msra.mxu0 %v35
    %174 = vmatprep.subr.mxu0 0.0
    %175 = vmatpush1.msra.mxu0 %v36
    %176 = vmatprep.subr.mxu0 0.0
    %177 = vmatpush1.msra.mxu0 %v37
    %178 = vmatprep.subr.mxu0 0.0
    %179 = vmatpush1.msra.mxu0 %v38
    %180 = vmatprep.subr.mxu0 0.0
    %181 = vmatpush1.msra.mxu0 %v39
    %182 = vmatprep.subr.mxu0 0.0
    %183 = vmatpush1.msra.mxu0 %v40
    %184 = vmatprep.subr.mxu0 0.0
    %185 = vmatpush1.msra.mxu0 %v41
    %186 = vmatprep.subr.mxu0 0.0
    %187 = vmatpush1.msra.mxu0 0.0
    %188 = vmatprep.subr.mxu0 0.0
    %189 = vmatpush1.msra.mxu0 0.0
    %190 = vmatprep.subr.mxu0 0.0
    %191 = vmatpush1.msra.mxu0 0.0
    %192 = vmatprep.subr.mxu0 0.0
    %193 = vmatpush1.msra.mxu0 0.0
    %194 = vmatprep.subr.mxu0 0.0
    %195 = vmatpush1.msra.mxu0 0.0
    %196 = vmatprep.subr.mxu0 0.0
    %197 = vmatpush1.msra.mxu0 0.0
    %198 = vmatprep.subr.mxu0 0.0
    %199 = vmatpush1.msra.mxu0 0.0
    %200 = vmatprep.subr.mxu0 0.0
    %201 = vmatpush1.msra.mxu0 0.0
    %202 = vmatprep.subr.mxu0 0.0
    %203 = vmatpush1.msra.mxu0 0.0
    %204 = vmatprep.subr.mxu0 0.0
    %205 = vmatpush1.msra.mxu0 0.0
    %206 = vmatprep.subr.mxu0 0.0
    %207 = vmatpush1.msra.mxu0 0.0
    %208 = vmatprep.subr.mxu0 0.0
    %209 = vmatpush1.msra.mxu0 0.0
    %210 = vmatprep.subr.mxu0 0.0
    %211 = vmatpush1.msra.mxu0 0.0
    %212 = vmatprep.subr.mxu0 0.0
    %213 = vmatpush1.msra.mxu0 0.0
    %214 = vmatprep.subr.mxu0 0.0
    %215 = vmatpush1.msra.mxu0 0.0
    %216 = vmatprep.subr.mxu0 0.0
    %217 = vmatpush1.msra.mxu0 0.0
    %218 = vmatprep.mubr.f32.mxu0 0.0
    %219 = vmatmul.mubr.f32.gmra.mrb[0].mxu0 %v146
    %v220 = vpop.f32.mrb[0].mxu0
    %v221 = vadd.f32 %v153, %v220
    %v222 = vpop.f32.mrb[0].mxu0
    %223 = vmatprep.mubr.f32.mxu0 0.0
    %224 = vmatmul.mubr.f32.gmra.mrb[0].mxu0 %v147
    %v225 = vpop.f32.mrb[0].mxu0
    %v226 = vadd.f32 %v153, %v225
    %v227 = vpop.f32.mrb[0].mxu0
    %228 = vmatprep.mubr.f32.mxu0 0.0
    %229 = vmatmul.mubr.f32.gmra.mrb[0].mxu0 %v148
    %v230 = vpop.f32.mrb[0].mxu0
    %v231 = vadd.f32 %v153, %v230
    %v232 = vpop.f32.mrb[0].mxu0
    %233 = vmatprep.mubr.f32.mxu0 0.0
    %234 = vmatmul.mubr.f32.gmra.mrb[0].mxu0 %v149
    %v235 = vpop.f32.mrb[0].mxu0
    %v236 = vadd.f32 %v153, %v235
    %v237 = vpop.f32.mrb[0].mxu0
    %238 = vdwg.mxu0
    %239 = vst.msk [vmem:[#allocation2] sm:$0xff] %vm48, %v221
    %240 = vst.msk [vmem:[#allocation2 + $0x8] sm:$0xff] %vm48, %v226
    %241 = vst.msk [vmem:[#allocation2 + $0x10] sm:$0xff] %vm48, %v231
    %242 = vst.msk [vmem:[#allocation2 + $0x18] sm:$0xff] %vm48, %v236
    // Predicated region
    $region18: #{tpu_custom_call.1} parent=1 // pred_check
      _
    $region19: #{tpu_custom_call.1} parent=1 // pred_check_branch
      %244 = sbr.rel (0) target = $region21
    $region20: #{tpu_custom_call.1} parent=1 // pred_region
      %s246 = ssub.s32 512, 512
      %247 = vsyncadd [#allocation3], %s246
      %s248 = sshll.u32 [#allocation2], 4
      %s249 = int_to_ptr.vmem [resolvable:$true] %s248
      %254 = dma.vmem_to_hbm [thread:$0]  %s249, 512, %s4, [#allocation3], 128, 128, 8
    $region21: #{tpu_custom_call.1} parent=1 // pred_fallthru
      _
    // Predicated region
    $region22: #{tpu_custom_call.1} parent=1 // pred_check
      _
    $region23: #{tpu_custom_call.1} parent=1 // pred_check_branch
      %256 = sbr.rel (0) target = $region25
    $region24: #{tpu_custom_call.1} parent=1 // pred_region
      %257 = dma.done [#allocation3], 512
    $region25: #{tpu_custom_call.1} parent=1 // pred_fallthru
      _
    %258 = vsyncpa [#allocation3], 1

</llo_original>
